<compile_context>
chip_gen: v6e
topology: v6e:2x2x1
jax: 0.10.0
libtpu: 0.0.40
codegen_flags: <defaults>
</compile_context>

<pallas_src>
import jax
import jax.numpy as jnp
from jax.experimental import pallas as pl
from jax.experimental.pallas import tpu as pltpu


def _lambda_kernel(x_ref, a_ref, o_ref):
    # Elementwise cube in the input precision (f32) on the VPU, then a
    # lane-dense matmul on the MXU with f32 accumulation.
    x = x_ref[...]
    x3 = x * x * x
    a = a_ref[...]
    o_ref[...] = jnp.dot(
        x3.astype(a.dtype), a, preferred_element_type=jnp.float32
    ).astype(o_ref.dtype)


def lambda_forward(x, a, *, tm=512, matmul_dtype=jnp.float32):
    """Pallas implementation of Lambda(f)(x) with f(x) = (x**3) @ a.

    x: [B, H] float32, a: [H, H] float32 -> [B, H] float32.

    The hidden dim is padded to a multiple of 128 (lane-dense stores, full
    MXU width) and rows are tiled with a parallel 1-D grid (TM rows per
    step).  A uses a constant index_map so it is loaded into VMEM once and
    reused across all row tiles.  Set matmul_dtype=jnp.bfloat16 on v6e/v7x
    for higher MXU throughput (accumulation stays f32).
    """
    B, H = x.shape
    assert a.shape == (H, H)

    # Lane-dense hidden dim (multiple of 128).
    Hp = max(128, pl.cdiv(H, 128) * 128)
    # Row tile: big (default 512) when the batch is large, otherwise just the
    # batch rounded up to the 8-row sublane granularity.
    TM = tm if B >= tm else max(8, pl.cdiv(B, 8) * 8)
    Bp = pl.cdiv(B, TM) * TM

    # Zero-pad outside the kernel; padded K-columns are zero so they do not
    # perturb valid outputs, padded rows / output columns are sliced away.
    xp = x if (Bp == B and Hp == H) else jnp.pad(x, ((0, Bp - B), (0, Hp - H)))
    ap = a if Hp == H else jnp.pad(a, ((0, Hp - H), (0, Hp - H)))
    ap = ap.astype(matmul_dtype)

    grid = (Bp // TM,)
    a_itemsize = jnp.dtype(matmul_dtype).itemsize

    # Scoped-VMEM budget: double-buffered x and out tiles + resident A,
    # with headroom; clamped to be safe on v7x (64 MiB physical VMEM).
    vmem_bytes = 2 * (TM * Hp * 4) * 2 + 2 * (Hp * Hp * a_itemsize) + (4 << 20)
    vmem_bytes = int(min(max(vmem_bytes, 16 << 20), 64 << 20))

    cost = pl.CostEstimate(
        flops=2 * Bp * Hp * Hp + 2 * Bp * Hp,
        transcendentals=0,
        bytes_accessed=Bp * Hp * 4 + Hp * Hp * a_itemsize + Bp * Hp * 4,
    )

    out_p = pl.pallas_call(
        _lambda_kernel,
        out_shape=jax.ShapeDtypeStruct((Bp, Hp), x.dtype),
        grid=grid,
        in_specs=[
            pl.BlockSpec((TM, Hp), lambda i: (i, 0)),   # row tile of x
            pl.BlockSpec((Hp, Hp), lambda i: (0, 0)),   # A resident in VMEM
        ],
        out_specs=pl.BlockSpec((TM, Hp), lambda i: (i, 0)),
        compiler_params=pltpu.CompilerParams(
            dimension_semantics=("parallel",),
            vmem_limit_bytes=vmem_bytes,
        ),
        cost_estimate=cost,
    )(xp, ap)

    if Bp == B and Hp == H:
        return out_p
    return out_p[:B, :H]


if __name__ == "__main__":
    key = jax.random.PRNGKey(0)
    kx, ka, kx2, ka2 = jax.random.split(key, 4)

    # Small module-sized case (padded to lane-dense 128 internally).
    B, H = 8, 32
    x = jax.random.normal(kx, (B, H), dtype=jnp.float32)
    a = jax.random.normal(ka, (H, H), dtype=jnp.float32) * 0.1
    out = jax.block_until_ready(lambda_forward(x, a))
    ref = (x ** 3) @ a
    assert out.shape == (B, H)
    assert jnp.allclose(out, ref, atol=1e-4, rtol=1e-4)

    # Batched, lane-dense case: amortizes launch overhead and exercises the
    # parallel row grid (grid=(2,), TM=512) with A VMEM-resident.
    B2, H2 = 1024, 128
    x2 = jax.random.normal(kx2, (B2, H2), dtype=jnp.float32)
    a2 = jax.random.normal(ka2, (H2, H2), dtype=jnp.float32) * 0.05
    out2 = jax.block_until_ready(lambda_forward(x2, a2, tm=512))
    ref2 = jnp.dot(x2 ** 3, a2, precision=jax.lax.Precision.HIGHEST)
    assert out2.shape == (B2, H2)
    assert jnp.allclose(out2, ref2, atol=1e-3, rtol=1e-3)

    print("KERNEL_OK")
</pallas_src>

<mosaic_0001>
module attributes {stable_mosaic.version = 11 : i64} {
  func.func @_lambda_kernel(%arg0: i32, %arg1: memref<8x128xf32, #tpu.memory_space<vmem>>, %arg2: memref<128x128xf32, #tpu.memory_space<vmem>>, %arg3: memref<8x128xf32, #tpu.memory_space<vmem>>) attributes {dimension_semantics = [#tpu.dimension_semantics<parallel>], iteration_bounds = array<i64: 1>, scalar_prefetch = 0 : i64, scratch_operands = 0 : i64, tpu.core_type = #tpu.core_type<tc>, window_params = [{transform_indices = @transform_0, window_bounds = array<i64: 8, 128>}, {pipeline_mode = #tpu.pipeline_mode<synchronous>, transform_indices = @transform_1, window_bounds = array<i64: 128, 128>}, {transform_indices = @transform_2, window_bounds = array<i64: 8, 128>}]} {
    %c0 = arith.constant 0 : index
    %c0_0 = arith.constant 0 : index
    %0 = vector.load %arg1[%c0, %c0_0] : memref<8x128xf32, #tpu.memory_space<vmem>>, vector<8x128xf32>
    %1 = arith.mulf %0, %0 : vector<8x128xf32>
    %2 = arith.mulf %1, %0 : vector<8x128xf32>
    %c0_1 = arith.constant 0 : index
    %c0_2 = arith.constant 0 : index
    %3 = vector.load %arg2[%c0_1, %c0_2] : memref<128x128xf32, #tpu.memory_space<vmem>>, vector<128x128xf32>
    %cst = arith.constant dense<0.000000e+00> : vector<8x128xf32>
    %4 = tpu.matmul %2, %3, %cst {dimension_numbers = #tpu.dot_dimension_numbers<[1], [0], [0], [1], [0, 0, 1, 1], [], []>} : vector<8x128xf32>, vector<128x128xf32>, vector<8x128xf32> -> vector<8x128xf32>
    %c0_3 = arith.constant 0 : index
    %c0_4 = arith.constant 0 : index
    %5 = vector.load %arg3[%c0_3, %c0_4] : memref<8x128xf32, #tpu.memory_space<vmem>>, vector<8x128xf32>
    tpu.vector_store %arg3[%c0_3, %c0_4], %4 {strides = array<i32>} : memref<8x128xf32, #tpu.memory_space<vmem>>, vector<8x128xf32>,
    return
  }
  func.func @transform_0(%arg0: i32) -> (i32, i32) {
    %c0_i32 = arith.constant 0 : i32
    %c0_i32_0 = arith.constant 0 : i32
    return %arg0, %c0_i32 : i32, i32
  }
  func.func @transform_1(%arg0: i32) -> (i32, i32) {
    %c0_i32 = arith.constant 0 : i32
    %c0_i32_0 = arith.constant 0 : i32
    %c0_i32_1 = arith.constant 0 : i32
    return %c0_i32, %c0_i32_0 : i32, i32
  }
  func.func @transform_2(%arg0: i32) -> (i32, i32) {
    %c0_i32 = arith.constant 0 : i32
    %c0_i32_0 = arith.constant 0 : i32
    return %arg0, %c0_i32 : i32, i32
  }
}

</mosaic_0001>

<llo_original>
// kernel: tpu_custom_call.1
$region0: #{tpu_custom_call.1}
  #allocation0 [shape = 'u32[]', space=smem, size = 0x4, offset = 0x4, fixed_abs, tag = 'smem constant byte address 0x4 - core index']
  #allocation1 [shape = 'u32[144,128]{1,0:T(1,128)}', space=vmem, size = 0x12000, scoped, tag = 'internal scratch']
  %s0 = inlined_call_operand.hbm [shape: f32[8,128], index: 0, kind: input, shape index: {}]
  %s1 = inlined_call_operand.hbm [shape: f32[128,128], index: 1, kind: input, shape index: {}]
  %s2 = inlined_call_operand.hbm [shape: f32[8,128], index: 2, kind: output, shape index: {}]
  %s3 = sld [smem:[#allocation0]]
  $region26: #{tpu_custom_call.1} parent=0
    _
  %s5 = ssub.s32 1, %s3
  %s6 = scalar_select 0, %s5, %s3
  $region1: #{tpu_custom_call.1} parent=0
    #allocation2 [shape = 'u8[4096]{0}', space=vmem, size = 0x1000, scoped, tag = 'input window, operand 0, single buffered']
    #allocation3 [shape = 's32[1]{0}', space=sflag, size = 0x4, scoped, tag = 'scoped memory for tpu_custom_call.1']
    #allocation4 [shape = 's32[1]{0}', space=sflag, size = 0x4, scoped, tag = 'scoped memory for tpu_custom_call.1']
    #allocation5 [shape = 'u8[65536]{0}', space=vmem, size = 0x10000, scoped, tag = 'input window, operand 1, single buffered']
    #allocation6 [shape = 's32[1]{0}', space=sflag, size = 0x4, scoped, tag = 'scoped memory for tpu_custom_call.1']
    #allocation7 [shape = 'u8[4096]{0}', space=vmem, size = 0x1000, scoped, tag = 'output window, operand 0, single buffered']
    %7 = vsyncpa [#allocation3], 0
    %8 = vsyncpa [#allocation6], 0
    %9 = vsyncpa [#allocation4], 0
    // Predicated region
    $region2: #{tpu_custom_call.1} parent=1 // pred_check
      _
    $region3: #{tpu_custom_call.1} parent=1 // pred_check_branch
      %11 = sbr.rel (0) target = $region5
    $region4: #{tpu_custom_call.1} parent=1 // pred_region
      %s13 = ssub.s32 128, 128
      %14 = vsyncadd [#allocation3], %s13
      %s16 = sshll.u32 [#allocation2], 4
      %s17 = int_to_ptr.vmem [resolvable:$true] %s16
      %19 = dma.hbm_to_vmem [thread:$0]  %s0, 128, %s17, [#allocation3]
    $region5: #{tpu_custom_call.1} parent=1 // pred_fallthru
      _
    // Predicated region
    $region6: #{tpu_custom_call.1} parent=1 // pred_check
      _
    $region7: #{tpu_custom_call.1} parent=1 // pred_check_branch
      %21 = sbr.rel (0) target = $region9
    $region8: #{tpu_custom_call.1} parent=1 // pred_region
      %s23 = ssub.s32 2048, 2048
      %24 = vsyncadd [#allocation6], %s23
      %s25 = sshll.u32 [#allocation5], 4
      %s26 = int_to_ptr.vmem [resolvable:$true] %s25
      %31 = dma.hbm_to_vmem [thread:$0]  %s1, 2048, %s26, [#allocation6], 128, 128, 8
    $region9: #{tpu_custom_call.1} parent=1 // pred_fallthru
      _
    // Predicated region
    $region10: #{tpu_custom_call.1} parent=1 // pred_check
      _
    $region11: #{tpu_custom_call.1} parent=1 // pred_check_branch
      %33 = sbr.rel (0) target = $region13
    $region12: #{tpu_custom_call.1} parent=1 // pred_region
      %34 = dma.done [#allocation3], 128
    $region13: #{tpu_custom_call.1} parent=1 // pred_fallthru
      _
    // Predicated region
    $region14: #{tpu_custom_call.1} parent=1 // pred_check
      _
    $region15: #{tpu_custom_call.1} parent=1 // pred_check_branch
      %36 = sbr.rel (0) target = $region17
    $region16: #{tpu_custom_call.1} parent=1 // pred_region
      %37 = dma.done [#allocation6], 2048
    $region17: #{tpu_custom_call.1} parent=1 // pred_fallthru
      _
    %v38 = vld [vmem:[#allocation2] sm:$0xff]
    %v39 = vmul.f32 %v38, %v38
    %v40 = vmul.f32 %v39, %v38
    %v41 = vld [vmem:[#allocation5] sm:$0xff]
    %v42 = vld [vmem:[#allocation5 + $0x8] sm:$0xff]
    %v43 = vld [vmem:[#allocation5 + $0x10] sm:$0xff]
    %v44 = vld [vmem:[#allocation5 + $0x18] sm:$0xff]
    %v45 = vld [vmem:[#allocation5 + $0x20] sm:$0xff]
    %v46 = vld [vmem:[#allocation5 + $0x28] sm:$0xff]
    %v47 = vld [vmem:[#allocation5 + $0x30] sm:$0xff]
    %v48 = vld [vmem:[#allocation5 + $0x38] sm:$0xff]
    %v49 = vld [vmem:[#allocation5 + $0x40] sm:$0xff]
    %v50 = vld [vmem:[#allocation5 + $0x48] sm:$0xff]
    %v51 = vld [vmem:[#allocation5 + $0x50] sm:$0xff]
    %v52 = vld [vmem:[#allocation5 + $0x58] sm:$0xff]
    %v53 = vld [vmem:[#allocation5 + $0x60] sm:$0xff]
    %v54 = vld [vmem:[#allocation5 + $0x68] sm:$0xff]
    %v55 = vld [vmem:[#allocation5 + $0x70] sm:$0xff]
    %v56 = vld [vmem:[#allocation5 + $0x78] sm:$0xff]
    %57 = vmatprep.subr.mxu0 0.0
    %58 = vmatpush1.msra.mxu0 %v56
    %59 = vmatprep.subr.mxu0 0.0
    %60 = vmatpush1.msra.mxu0 %v55
    %61 = vmatprep.subr.mxu0 0.0
    %62 = vmatpush1.msra.mxu0 %v54
    %63 = vmatprep.subr.mxu0 0.0
    %64 = vmatpush1.msra.mxu0 %v53
    %65 = vmatprep.subr.mxu0 0.0
    %66 = vmatpush1.msra.mxu0 %v52
    %67 = vmatprep.subr.mxu0 0.0
    %68 = vmatpush1.msra.mxu0 %v51
    %69 = vmatprep.subr.mxu0 0.0
    %70 = vmatpush1.msra.mxu0 %v50
    %71 = vmatprep.subr.mxu0 0.0
    %72 = vmatpush1.msra.mxu0 %v49
    %73 = vmatprep.subr.mxu0 0.0
    %74 = vmatpush1.msra.mxu0 %v48
    %75 = vmatprep.subr.mxu0 0.0
    %76 = vmatpush1.msra.mxu0 %v47
    %77 = vmatprep.subr.mxu0 0.0
    %78 = vmatpush1.msra.mxu0 %v46
    %79 = vmatprep.subr.mxu0 0.0
    %80 = vmatpush1.msra.mxu0 %v45
    %81 = vmatprep.subr.mxu0 0.0
    %82 = vmatpush1.msra.mxu0 %v44
    %83 = vmatprep.subr.mxu0 0.0
    %84 = vmatpush1.msra.mxu0 %v43
    %85 = vmatprep.subr.mxu0 0.0
    %86 = vmatpush1.msra.mxu0 %v42
    %87 = vmatprep.subr.mxu0 0.0
    %88 = vmatpush1.msra.mxu0 %v41
    %89 = vmatprep.subr.mxu0 0.0
    %90 = vmatpush2.msra.mxu0 0.0
    %91 = vmatprep.subr.mxu0 0.0
    %92 = vmatpush2.msra.mxu0 0.0
    %93 = vmatprep.subr.mxu0 0.0
    %94 = vmatpush2.msra.mxu0 0.0
    %95 = vmatprep.subr.mxu0 0.0
    %96 = vmatpush2.msra.mxu0 0.0
    %97 = vmatprep.subr.mxu0 0.0
    %98 = vmatpush2.msra.mxu0 0.0
    %99 = vmatprep.subr.mxu0 0.0
    %100 = vmatpush2.msra.mxu0 0.0
    %101 = vmatprep.subr.mxu0 0.0
    %102 = vmatpush2.msra.mxu0 0.0
    %103 = vmatprep.subr.mxu0 0.0
    %104 = vmatpush2.msra.mxu0 0.0
    %105 = vmatprep.subr.mxu0 0.0
    %106 = vmatpush2.msra.mxu0 0.0
    %107 = vmatprep.subr.mxu0 0.0
    %108 = vmatpush2.msra.mxu0 0.0
    %109 = vmatprep.subr.mxu0 0.0
    %110 = vmatpush2.msra.mxu0 0.0
    %111 = vmatprep.subr.mxu0 0.0
    %112 = vmatpush2.msra.mxu0 0.0
    %113 = vmatprep.subr.mxu0 0.0
    %114 = vmatpush2.msra.mxu0 0.0
    %115 = vmatprep.subr.mxu0 0.0
    %116 = vmatpush2.msra.mxu0 0.0
    %117 = vmatprep.subr.mxu0 0.0
    %118 = vmatpush2.msra.mxu0 0.0
    %119 = vmatprep.subr.mxu0 0.0
    %120 = vmatpush2.msra.mxu0 0.0
    %121 = vmatprep.mubr.f32.mxu0 0.0
    %122 = vmatmul.mubr.f32.gmra.mxu0 %v40
    %v123 = vpop.f32.mrf.mxu0
    %v124 = vadd.f32 0.0, %v123
    %v125 = vpop.f32.mrf.mxu0
    %126 = vdwg.mxu0
    %127 = vst [vmem:[#allocation7] sm:$0xff] %v124
    // Predicated region
    $region18: #{tpu_custom_call.1} parent=1 // pred_check
      _
    $region19: #{tpu_custom_call.1} parent=1 // pred_check_branch
      %129 = sbr.rel (0) target = $region21
    $region20: #{tpu_custom_call.1} parent=1 // pred_region
      %s131 = ssub.s32 128, 128
      %132 = vsyncadd [#allocation4], %s131
      %s134 = sshll.u32 [#allocation7], 4
      %s135 = int_to_ptr.vmem [resolvable:$true] %s134
      %137 = dma.vmem_to_hbm [thread:$0]  %s135, 128, %s2, [#allocation4]
    $region21: #{tpu_custom_call.1} parent=1 // pred_fallthru
      _
    // Predicated region
    $region22: #{tpu_custom_call.1} parent=1 // pred_check
      _
    $region23: #{tpu_custom_call.1} parent=1 // pred_check_branch
      %139 = sbr.rel (0) target = $region25
    $region24: #{tpu_custom_call.1} parent=1 // pred_region
      %140 = dma.done [#allocation4], 128
    $region25: #{tpu_custom_call.1} parent=1 // pred_fallthru
      _
    %141 = vsyncpa [#allocation3], 1
    %142 = vsyncpa [#allocation6], 1
    %143 = vsyncpa [#allocation4], 1

</llo_original>
